<compile_context>
chip_gen: v7x
topology: tpu7x:2x2x1
jax: 0.10.0
libtpu: 0.0.40
codegen_flags: <defaults>
</compile_context>

<pallas_src>
import functools

import jax
import jax.numpy as jnp
from jax import lax
from jax.experimental import pallas as pl
from jax.experimental.pallas import tpu as pltpu

_LANES = 128
_SUBLANES = 8                       # f32 vreg sublane count (accumulator granularity)
_TARGET_BLOCK_ROWS = 8192           # 8192 x 128 f32 = 4 MiB per input block (sweepable)
_VMEM_LIMIT_BYTES = 40 * 1024 * 1024
_MIN_PALLAS_BYTES = 1 << 20         # below ~1 MiB per tensor, plain fused XLA wins
_MAX_FOLD = 8                       # independent accumulation chains per tile


def _cdiv(a, b):
    return -(-a // b)


def _round_up(x, m):
    return _cdiv(x, m) * m


def _num_tensorcores():
    """Best-effort TensorCore count (2 on v7x, 1 on v5e/v6e).  Defaults to 2."""
    try:
        info = pltpu.get_tpu_info()
    except Exception:
        info = None
    if info is not None:
        for name in ("num_cores", "core_count", "num_tensorcores", "cores_per_chip"):
            v = getattr(info, name, None)
            try:
                v = int(v)
            except (TypeError, ValueError):
                continue
            if v > 0:
                return max(1, min(v, 4))
    # TODO(synk): verify with xprof that the leading "parallel" grid axis shards across
    # v7x's two TensorCores; switch to pltpu.CORE_PARALLEL if it does not.
    return 2


def _plain_jnp_loss(outputs, labels, loss_type):
    diff = outputs.astype(jnp.float32) - labels.astype(jnp.float32)
    r = jnp.maximum(diff, 0.0)
    val = r if loss_type == "l1" else r * r
    return jnp.mean(val)


def _cross_diff_kernel(o_ref, l_ref, out_ref, *, loss_type, rows, tile_rows,
                       n_blocks, fold, emit_ragged):
    """grid = (partition p [parallel], row-block k [arbitrary]).

    out_ref is a (1, 8, 128) f32 block resident across k (per-partition accumulator)."""
    p = pl.program_id(0)
    k = pl.program_id(1)

    @pl.when(k == 0)
    def _init():
        out_ref[...] = jnp.zeros_like(out_ref)

    diff = o_ref[...].astype(jnp.float32) - l_ref[...].astype(jnp.float32)
    r = jnp.maximum(diff, 0.0)                     # relu(diff)
    if loss_type == "l1":
        contrib = r                                # clip(diff, min=0)
    else:
        contrib = r * r                            # diff^2 * clip(sign(diff), 0) == relu(diff)^2

    def fold_to_vreg(x):
        # Fold (tile_rows, 128) -> (8, 128) via `fold` independent partial chains so the
        # VPU add chain is short enough to stay hidden under the per-tile DMA (v7x).
        if fold > 1:
            y = x.reshape(fold, -1, _SUBLANES, _LANES)
            y = jnp.sum(y, axis=1)                 # `fold` independent chains -> (fold, 8, 128)
            return jnp.sum(y, axis=0)              # short tree -> (8, 128)
        return jnp.sum(x.reshape(-1, _SUBLANES, _LANES), axis=0)

    if emit_ragged:
        # Only blocks that extend past `rows` (ragged tail / clamped dead block) pay for
        # masking; OOB rows hold unspecified data and must be zeroed before the fold.
        row_start = (p * n_blocks + k) * tile_rows
        is_full = row_start + tile_rows <= rows

        @pl.when(is_full)
        def _full():
            out_ref[...] += fold_to_vreg(contrib)[None]

        @pl.when(jnp.logical_not(is_full))
        def _ragged():
            rid = lax.broadcasted_iota(jnp.int32, (tile_rows, _LANES), 0)
            masked = jnp.where(rid + row_start < rows, contrib, 0.0)
            out_ref[...] += fold_to_vreg(masked)[None]
    else:
        out_ref[...] += fold_to_vreg(contrib)[None]


def cross_diff_loss(outputs, labels, loss_type="l1", *,
                    block_rows=_TARGET_BLOCK_ROWS,
                    min_pallas_bytes=_MIN_PALLAS_BYTES):
    """mean(clip(outputs - labels, min=0))      for loss_type='l1'
       mean(relu(outputs - labels)**2)          for loss_type='l2'   (matches the module)."""
    if outputs.shape != labels.shape:
        raise ValueError(f"shape mismatch: {outputs.shape} vs {labels.shape}")
    if outputs.dtype != labels.dtype:
        raise ValueError(f"dtype mismatch: {outputs.dtype} vs {labels.dtype}")
    if loss_type not in ("l1", "l2"):
        raise ValueError(f"unknown loss type {loss_type!r}")

    n_elems = outputs.size
    itemsize = jnp.dtype(outputs.dtype).itemsize

    # Small or non-lane-divisible inputs: a single fused XLA reduce already sits on the
    # HBM roofline, with no pallas_call launch overhead and no pad copy.
    if n_elems == 0 or n_elems % _LANES != 0 or n_elems * itemsize < min_pallas_bytes:
        return _plain_jnp_loss(outputs, labels, loss_type)

    rows = n_elems // _LANES
    # dtype-aware sublane alignment: (8,128) f32 / (16,128) bf16 / (32,128) 8-bit min tiles.
    row_align = {4: _SUBLANES, 2: 16, 1: 32}.get(itemsize, _SUBLANES)

    num_parts = max(1, min(_num_tensorcores(), rows // row_align))
    tile_rows = min(_round_up(block_rows, row_align),
                    _round_up(_cdiv(rows, num_parts), row_align))
    total_blocks = _cdiv(rows, tile_rows)          # blocks whose start row is in bounds
    n_blocks = _cdiv(total_blocks, num_parts)
    last_block = total_blocks - 1
    # True iff some block contains out-of-bounds rows (ragged tail and/or dead block).
    emit_ragged = num_parts * n_blocks * tile_rows != rows

    fold = _MAX_FOLD
    while fold > 1 and tile_rows % (_SUBLANES * fold) != 0:
        fold //= 2

    # Lane-dense [rows, 128] views -- pure metadata reshape, no extra HBM traffic.
    o2 = outputs.reshape(rows, _LANES)
    l2 = labels.reshape(rows, _LANES)

    kernel = functools.partial(
        _cross_diff_kernel, loss_type=loss_type, rows=rows, tile_rows=tile_rows,
        n_blocks=n_blocks, fold=fold, emit_ragged=emit_ragged)

    def in_map(p, k):
        # Clamp so a trailing "dead" block (possible when total_blocks % num_parts != 0)
        # re-reads the last in-bounds block; its contribution is fully masked to zero.
        return (jnp.minimum(p * n_blocks + k, last_block), 0)

    partials = pl.pallas_call(
        kernel,
        out_shape=jax.ShapeDtypeStruct((num_parts, _SUBLANES, _LANES), jnp.float32),
        grid_spec=pltpu.PrefetchScalarGridSpec(
            num_scalar_prefetch=0,
            grid=(num_parts, n_blocks),
            in_specs=[
                pl.BlockSpec((tile_rows, _LANES), in_map),
                pl.BlockSpec((tile_rows, _LANES), in_map),
            ],
            out_specs=pl.BlockSpec((1, _SUBLANES, _LANES), lambda p, k: (p, 0, 0)),
        ),
        compiler_params=pltpu.CompilerParams(
            dimension_semantics=("parallel", "arbitrary"),
            vmem_limit_bytes=_VMEM_LIMIT_BYTES,
        ),
    )(o2, l2)

    # Single tiny cross-lane reduce + mean scaling in the epilogue.
    # NOTE: per-lane f32 running sums are fine at these sizes; switch to a two-level
    # (per-block then tree) sum if extreme element counts demand tighter rounding.
    return jnp.sum(partials) / n_elems


def _reference(outputs, labels, loss_type):
    # Literal transcription of the PyTorch module's formulas.
    diff = outputs - labels
    if loss_type == "l1":
        return jnp.mean(jnp.maximum(diff, 0.0))
    return jnp.mean((diff ** 2) * jnp.maximum(jnp.sign(diff), 0.0))


if __name__ == "__main__":
    key = jax.random.PRNGKey(0)

    # The tiny [B, C, H, W] case takes the fused-XLA fallback; the two larger (still small)
    # cases exercise the Pallas kernel's exact-coverage and ragged (masked) tilings.
    shapes = [
        (2, 4, 16, 16),      # 2 KiB/tensor    -> small-input fallback path
        (2, 8, 128, 128),    # 1 MiB/tensor    -> Pallas path, exact tile coverage
        (4, 5, 193, 128),    # ~1.9 MiB/tensor -> Pallas path, ragged (masked) last block
    ]

    for shape in shapes:
        key, k1, k2 = jax.random.split(key, 3)
        outputs = jax.random.normal(k1, shape, dtype=jnp.float32)
        labels = jax.random.normal(k2, shape, dtype=jnp.float32)
        for loss_type in ("l1", "l2"):
            got = cross_diff_loss(outputs, labels, loss_type=loss_type)
            jax.block_until_ready(got)
            want = _reference(outputs, labels, loss_type)
            assert jnp.allclose(got, want, rtol=1e-5, atol=1e-6), (shape, loss_type, got, want)

    print("KERNEL_OK")
</pallas_src>

<mosaic_0001>
module attributes {stable_mosaic.version = 11 : i64} {
  func.func @_cross_diff_kernel(%arg0: i32, %arg1: i32, %arg2: memref<1024x128xf32, #tpu.memory_space<vmem>>, %arg3: memref<1024x128xf32, #tpu.memory_space<vmem>>, %arg4: memref<1x8x128xf32, #tpu.memory_space<vmem>>) attributes {dimension_semantics = [#tpu.dimension_semantics<parallel>, #tpu.dimension_semantics<arbitrary>], iteration_bounds = array<i64: 2, 1>, scalar_prefetch = 0 : i64, scratch_operands = 0 : i64, tpu.core_type = #tpu.core_type<tc>, window_params = [{transform_indices = @transform_0, window_bounds = array<i64: 1024, 128>}, {transform_indices = @transform_1, window_bounds = array<i64: 1024, 128>}, {transform_indices = @transform_2, window_bounds = array<i64: 1, 8, 128>}]} {
    %c0_i32 = arith.constant 0 : i32
    %0 = arith.cmpi eq, %arg1, %c0_i32 : i32
    %1 = arith.extui %0 : i1 to i32
    %c0_i32_0 = arith.constant 0 : i32
    %2 = arith.cmpi ne, %1, %c0_i32_0 : i32
    scf.if %2 {
      %cst_12 = arith.constant 0.000000e+00 : f32
      %15 = vector.broadcast %cst_12 : f32 to vector<1x8x128xf32>
      %c0_13 = arith.constant 0 : index
      %c0_14 = arith.constant 0 : index
      %c0_15 = arith.constant 0 : index
      %16 = vector.load %arg4[%c0_13, %c0_14, %c0_15] : memref<1x8x128xf32, #tpu.memory_space<vmem>>, vector<1x8x128xf32>
      tpu.vector_store %arg4[%c0_13, %c0_14, %c0_15], %15 {strides = array<i32>} : memref<1x8x128xf32, #tpu.memory_space<vmem>>, vector<1x8x128xf32>,
    } else {
    }
    %c0 = arith.constant 0 : index
    %c0_1 = arith.constant 0 : index
    %3 = vector.load %arg2[%c0, %c0_1] : memref<1024x128xf32, #tpu.memory_space<vmem>>, vector<1024x128xf32>
    %c0_2 = arith.constant 0 : index
    %c0_3 = arith.constant 0 : index
    %4 = vector.load %arg3[%c0_2, %c0_3] : memref<1024x128xf32, #tpu.memory_space<vmem>>, vector<1024x128xf32>
    %5 = arith.subf %3, %4 : vector<1024x128xf32>
    %cst = arith.constant 0.000000e+00 : f32
    %6 = vector.broadcast %cst : f32 to vector<1024x128xf32>
    %7 = arith.maximumf %5, %6 : vector<1024x128xf32>
    %c0_4 = arith.constant 0 : index
    %c0_5 = arith.constant 0 : index
    %c0_6 = arith.constant 0 : index
    %8 = vector.load %arg4[%c0_4, %c0_5, %c0_6] : memref<1x8x128xf32, #tpu.memory_space<vmem>>, vector<1x8x128xf32>
    %9 = vector.shape_cast %7 : vector<1024x128xf32> to vector<8x16x8x128xf32>
    %cst_7 = arith.constant dense<0.000000e+00> : vector<8x8x128xf32>
    %10 = vector.multi_reduction <add>, %9, %cst_7 [1] : vector<8x16x8x128xf32> to vector<8x8x128xf32>
    %cst_8 = arith.constant dense<0.000000e+00> : vector<8x128xf32>
    %11 = vector.multi_reduction <add>, %10, %cst_8 [0] : vector<8x8x128xf32> to vector<8x128xf32>
    %12 = vector.shape_cast %11 : vector<8x128xf32> to vector<1x8x128xf32>
    %13 = arith.addf %8, %12 : vector<1x8x128xf32>
    %c0_9 = arith.constant 0 : index
    %c0_10 = arith.constant 0 : index
    %c0_11 = arith.constant 0 : index
    %14 = vector.load %arg4[%c0_9, %c0_10, %c0_11] : memref<1x8x128xf32, #tpu.memory_space<vmem>>, vector<1x8x128xf32>
    tpu.vector_store %arg4[%c0_9, %c0_10, %c0_11], %13 {strides = array<i32>} : memref<1x8x128xf32, #tpu.memory_space<vmem>>, vector<1x8x128xf32>,
    return
  }
  func.func @transform_0(%arg0: i32, %arg1: i32) -> (i32, i32) {
    %c1_i32 = arith.constant 1 : i32
    %0 = arith.muli %arg0, %c1_i32 : i32
    %1 = arith.addi %0, %arg1 : i32
    %c1_i32_0 = arith.constant 1 : i32
    %2 = arith.minsi %1, %c1_i32_0 : i32
    %c0_i32 = arith.constant 0 : i32
    %c0_i32_1 = arith.constant 0 : i32
    return %2, %c0_i32 : i32, i32
  }
  func.func @transform_1(%arg0: i32, %arg1: i32) -> (i32, i32) {
    %c1_i32 = arith.constant 1 : i32
    %0 = arith.muli %arg0, %c1_i32 : i32
    %1 = arith.addi %0, %arg1 : i32
    %c1_i32_0 = arith.constant 1 : i32
    %2 = arith.minsi %1, %c1_i32_0 : i32
    %c0_i32 = arith.constant 0 : i32
    %c0_i32_1 = arith.constant 0 : i32
    return %2, %c0_i32 : i32, i32
  }
  func.func @transform_2(%arg0: i32, %arg1: i32) -> (i32, i32, i32) {
    %c0_i32 = arith.constant 0 : i32
    %c0_i32_0 = arith.constant 0 : i32
    %c0_i32_1 = arith.constant 0 : i32
    return %arg0, %c0_i32, %c0_i32_0 : i32, i32, i32
  }
}

</mosaic_0001>

<llo_original>
// kernel: tpu_custom_call.1
$region0: #{tpu_custom_call.1}
  #allocation0 [shape = 'u32[]', space=smem, size = 0x4, offset = 0x4, fixed_abs, tag = 'smem constant byte address 0x4 - core index']
  #allocation1 [shape = 'u32[144,128]{1,0:T(1,128)}', space=vmem, size = 0x12000, scoped, tag = 'internal scratch']
  %s0 = inlined_call_operand.hbm [shape: f32[2048,128], index: 0, kind: input, shape index: {}]
  %s1 = inlined_call_operand.hbm [shape: f32[2048,128], index: 1, kind: input, shape index: {}]
  %s2 = inlined_call_operand.hbm [shape: f32[2,8,128], index: 2, kind: output, shape index: {}]
  %s3 = sld [smem:[#allocation0]]
  $region53: #{tpu_custom_call.1} parent=0
    _
  %s5 = ssub.s32 1, %s3
  %s6 = scalar_select 0, %s5, %s3
  $region1: #{tpu_custom_call.1} parent=0
    #allocation2 [shape = 'u8[1048576]{0}', space=vmem, size = 0x100000, scoped, tag = 'input window, operand 0']
    #allocation3 [shape = 's32[2]{0}', space=sflag, size = 0x8, scoped, tag = 'scoped memory for tpu_custom_call.1']
    #allocation4 [shape = 's32[2]{0}', space=sflag, size = 0x8, scoped, tag = 'scoped memory for tpu_custom_call.1']
    #allocation5 [shape = 'u8[1048576]{0}', space=vmem, size = 0x100000, scoped, tag = 'input window, operand 1']
    #allocation6 [shape = 's32[2]{0}', space=sflag, size = 0x8, scoped, tag = 'scoped memory for tpu_custom_call.1']
    #allocation7 [shape = 'u8[8192]{0}', space=vmem, size = 0x2000, scoped, tag = 'output window, operand 0']
    %7 = vsyncpa [#allocation3], 0
    %s8 = scalar_lea.sflag [#allocation3], 1
    %9 = vsyncpa %s8, 0
    %10 = vsyncpa [#allocation6], 0
    %s11 = scalar_lea.sflag [#allocation6], 1
    %12 = vsyncpa %s11, 0
    %13 = vsyncpa [#allocation4], 0
    %s14 = scalar_lea.sflag [#allocation4], 1
    %15 = vsyncpa %s14, 0
    loop: start=0, step=1, limit=4
    $region2: #{tpu_custom_call.1} parent=1 // loop_pre_header
      _
    $region3: #{tpu_custom_call.1} parent=1 // loop_header
      %s17 = sphi 0, %s21
      %p18 = scmp.ge.s32.totalorder %s17, 4
      %s24 = sphi 0, %s36
      %s25 = sphi 0, %s32
      %s26 = sphi 0, %s24
      %s27 = sphi 0, %s25
      %s28 = sphi 0, %s26
      %s29 = sphi 0, %s27
      %s45 = sphi 0, %s47
      %s48 = sphi 0, %s45
      %s49 = sphi 0, %s48
      %s65 = sphi 0, %s49
      %s77 = sphi 0, %s79
      %s80 = sphi 0, %s77
      %s81 = sphi 0, %s80
      %s97 = sphi 0, %s81
      %s103 = sphi 0, %s105
      %s106 = sphi 0, %s103
      %s107 = sphi 0, %s106
      %s123 = sphi 0, %s107
    $region4: #{tpu_custom_call.1} parent=1 // loop_header_branch
      %20 = sbr.rel (%p18) target = $region8
    $region5: #{tpu_custom_call.1} parent=1 // loop_body
      %s22 = ssub.s32 %s17, 1
      %s23 = ssub.s32 %s17, 2
      %s30 = sadd.s32 1, %s25
      %p31 = scmp.ge.s32.totalorder %s30, 1
      %s32 = scalar_select %p31, 0, %s30
      %s33 = sadd.s32 1, %s24
      %s34 = scalar_select %p31, %s33, %s24
      %p35 = scmp.ge.s32.totalorder %s34, 2
      %s36 = scalar_select %p35, 0, %s34
      %s37 = sadd.s32 %s24, %s25
      %p38 = scmp.lt.s32.totalorder %s37, 1
      %s39 = scalar_select %p38, %s37, 1
      %s40 = sadd.s32 %s36, %s32
      %p41 = scmp.lt.s32.totalorder %s40, 1
      %s42 = scalar_select %p41, %s40, 1
      %s43 = ssub.s32 %s39, %s42
      %p44 = scmp.eq.s32.totalorder %s43, 0
      %s46 = sadd.s32 %s45, 1
      %s47 = scalar_select %p44, %s45, %s46
      %p50 = pneg %p44
      %p51 = scmp.eq.s32.totalorder %s17, 1
      %p52 = por %p50, %p51
      %p53 = scmp.ne.s32.totalorder %s45, %s48
      %p54 = scmp.eq.s32.totalorder %s17, 0
      %p55 = por %p53, %p54
      %p56 = scmp.ne.s32.totalorder %s45, %s48
      %p57 = scmp.eq.s32.totalorder %s22, 1
      %p58 = por %p56, %p57
      %p59 = scmp.ne.s32.totalorder %s48, %s49
      %p60 = scmp.eq.s32.totalorder %s22, 0
      %p61 = por %p59, %p60
      %p62 = scmp.ne.s32.totalorder %s48, %s49
      %p63 = scmp.eq.s32.totalorder %s23, 1
      %p64 = por %p62, %p63
      %p66 = scmp.ne.s32.totalorder %s49, %s65
      %p67 = scmp.eq.s32.totalorder %s23, 0
      %p68 = por %p66, %p67
      %s69 = sadd.s32 %s24, %s25
      %p70 = scmp.lt.s32.totalorder %s69, 1
      %s71 = scalar_select %p70, %s69, 1
      %s72 = sadd.s32 %s36, %s32
      %p73 = scmp.lt.s32.totalorder %s72, 1
      %s74 = scalar_select %p73, %s72, 1
      %s75 = ssub.s32 %s71, %s74
      %p76 = scmp.eq.s32.totalorder %s75, 0
      %s78 = sadd.s32 %s77, 1
      %s79 = scalar_select %p76, %s77, %s78
      %p82 = pneg %p76
      %p83 = scmp.eq.s32.totalorder %s17, 1
      %p84 = por %p82, %p83
      %p85 = scmp.ne.s32.totalorder %s77, %s80
      %p86 = scmp.eq.s32.totalorder %s17, 0
      %p87 = por %p85, %p86
      %p88 = scmp.ne.s32.totalorder %s77, %s80
      %p89 = scmp.eq.s32.totalorder %s22, 1
      %p90 = por %p88, %p89
      %p91 = scmp.ne.s32.totalorder %s80, %s81
      %p92 = scmp.eq.s32.totalorder %s22, 0
      %p93 = por %p91, %p92
      %p94 = scmp.ne.s32.totalorder %s80, %s81
      %p95 = scmp.eq.s32.totalorder %s23, 1
      %p96 = por %p94, %p95
      %p98 = scmp.ne.s32.totalorder %s81, %s97
      %p99 = scmp.eq.s32.totalorder %s23, 0
      %p100 = por %p98, %p99
      %s101 = ssub.s32 %s24, %s36
      %p102 = scmp.eq.s32.totalorder %s101, 0
      %s104 = sadd.s32 %s103, 1
      %s105 = scalar_select %p102, %s103, %s104
      %p108 = pneg %p102
      %p109 = scmp.eq.s32.totalorder %s17, 1
      %p110 = por %p108, %p109
      %p111 = scmp.ne.s32.totalorder %s103, %s106
      %p112 = scmp.eq.s32.totalorder %s17, 0
      %p113 = por %p111, %p112
      %p114 = scmp.ne.s32.totalorder %s103, %s106
      %p115 = scmp.eq.s32.totalorder %s22, 1
      %p116 = por %p114, %p115
      %p117 = scmp.ne.s32.totalorder %s106, %s107
      %p118 = scmp.eq.s32.totalorder %s22, 0
      %p119 = por %p117, %p118
      %p120 = scmp.ne.s32.totalorder %s106, %s107
      %p121 = scmp.eq.s32.totalorder %s23, 1
      %p122 = por %p120, %p121
      %p124 = scmp.ne.s32.totalorder %s107, %s123
      %p125 = scmp.eq.s32.totalorder %s23, 0
      %p126 = por %p124, %p125
      %p127 = scmp.le.s32.totalorder 1, %s17
      %p128 = scmp.lt.s32.totalorder %s17, 3
      %p129 = pnand %p127, %p128
      %p130 = pneg %p129
      // Predicated region
      $region9: #{tpu_custom_call.1} parent=5 // pred_check
        _
      $region10: #{tpu_custom_call.1} parent=5 // pred_check_branch
        %132 = sbr.rel (%p129) target = $region12
      $region11: #{tpu_custom_call.1} parent=5 // pred_region
        %s133 = ssub.s32 %s17, 1
      $region12: #{tpu_custom_call.1} parent=5 // pred_fallthru
        _
      %p134 = scmp.lt.s32.totalorder %s17, 2
      // Predicated region
      $region13: #{tpu_custom_call.1} parent=5 // pred_check
        %p135 = pneg %p134
      $region14: #{tpu_custom_call.1} parent=5 // pred_check_branch
        %137 = sbr.rel (%p135) target = $region16
      $region15: #{tpu_custom_call.1} parent=5 // pred_region
        // Predicated region
        $region17: #{tpu_custom_call.1} parent=15 // pred_check
          %p138 = pneg %p55
        $region18: #{tpu_custom_call.1} parent=15 // pred_check_branch
          %140 = sbr.rel (%p138) target = $region20
        $region19: #{tpu_custom_call.1} parent=15 // pred_region
          %s141 = sand.u32 %s45, 1
          %s142 = scalar_lea.sflag [#allocation3], %s141
          %s143 = sand.u32 %s45, 1
          %s144 = smul.addr %s143, 1024
          %s145 = scalar_lea.vmem [#allocation2], %s144
          %s146 = sadd.s32 %s24, %s25
          %p147 = scmp.lt.s32.totalorder %s146, 1
          %s148 = scalar_select %p147, %s146, 1
          %s149 = smul.u32 128, %s148
          %s151 = ssub.s32 16384, 16384
          %152 = vsyncadd %s142, %s151
          %s153 = smul.addr %s149, 128
          %s154 = scalar_lea.hbm %s0, %s153
          %s155 = sshll.u32 %s145, 4
          %s156 = int_to_ptr.vmem [resolvable:$true] %s155
          %161 = dma.hbm_to_vmem [thread:$0]  %s154, 16384, %s156, %s142, 128, 128, 8
        $region20: #{tpu_custom_call.1} parent=15 // pred_fallthru
          _
        // Predicated region
        $region21: #{tpu_custom_call.1} parent=15 // pred_check
          %p162 = pneg %p87
        $region22: #{tpu_custom_call.1} parent=15 // pred_check_branch
          %164 = sbr.rel (%p162) target = $region24
        $region23: #{tpu_custom_call.1} parent=15 // pred_region
          %s165 = sand.u32 %s77, 1
          %s166 = scalar_lea.sflag [#allocation6], %s165
          %s167 = sand.u32 %s77, 1
          %s168 = smul.addr %s167, 1024
          %s169 = scalar_lea.vmem [#allocation5], %s168
          %s170 = sadd.s32 %s24, %s25
          %p171 = scmp.lt.s32.totalorder %s170, 1
          %s172 = scalar_select %p171, %s170, 1
          %s173 = smul.u32 128, %s172
          %s175 = ssub.s32 16384, 16384
          %176 = vsyncadd %s166, %s175
          %s177 = smul.addr %s173, 128
          %s178 = scalar_lea.hbm %s1, %s177
          %s179 = sshll.u32 %s169, 4
          %s180 = int_to_ptr.vmem [resolvable:$true] %s179
          %185 = dma.hbm_to_vmem [thread:$0]  %s178, 16384, %s180, %s166, 128, 128, 8
        $region24: #{tpu_custom_call.1} parent=15 // pred_fallthru
          _
      $region16: #{tpu_custom_call.1} parent=5 // pred_fallthru
        _
      %p186 = scmp.le.s32.totalorder 1, %s17
      %p187 = scmp.lt.s32.totalorder %s17, 3
      %p188 = pnand %p186, %p187
      %p189 = pneg %p188
      // Predicated region
      $region25: #{tpu_custom_call.1} parent=5 // pred_check
        _
      $region26: #{tpu_custom_call.1} parent=5 // pred_check_branch
        %191 = sbr.rel (%p188) target = $region28
      $region27: #{tpu_custom_call.1} parent=5 // pred_region
        %s192 = ssub.s32 %s17, 1
        %s193 = sand.u32 %s48, 1
        %s194 = scalar_lea.sflag [#allocation3], %s193
        %s195 = sand.u32 %s48, 1
        %s196 = smul.addr %s195, 1024
        %s197 = scalar_lea.vmem [#allocation2], %s196
        // Predicated region
        $region29: #{tpu_custom_call.1} parent=27 // pred_check
          %p198 = pneg %p61
        $region30: #{tpu_custom_call.1} parent=27 // pred_check_branch
          %200 = sbr.rel (%p198) target = $region32
        $region31: #{tpu_custom_call.1} parent=27 // pred_region
          %201 = dma.done %s194, 16384
        $region32: #{tpu_custom_call.1} parent=27 // pred_fallthru
          _
        %s202 = sand.u32 %s80, 1
        %s203 = scalar_lea.sflag [#allocation6], %s202
        %s204 = sand.u32 %s80, 1
        %s205 = smul.addr %s204, 1024
        %s206 = scalar_lea.vmem [#allocation5], %s205
        // Predicated region
        $region33: #{tpu_custom_call.1} parent=27 // pred_check
          %p207 = pneg %p93
        $region34: #{tpu_custom_call.1} parent=27 // pred_check_branch
          %209 = sbr.rel (%p207) target = $region36
        $region35: #{tpu_custom_call.1} parent=27 // pred_region
          %210 = dma.done %s203, 16384
        $region36: #{tpu_custom_call.1} parent=27 // pred_fallthru
          _
        %s211 = sand.u32 %s48, 1
        %s212 = scalar_lea.sflag [#allocation3], %s211
        %s213 = sand.u32 %s48, 1
        %s214 = smul.addr %s213, 1024
        %s215 = scalar_lea.vmem [#allocation2], %s214
        %p216 = pneg %p61
        %p217 = pneg %p58
        %s218 = sand.u32 %s80, 1
        %s219 = scalar_lea.sflag [#allocation6], %s218
        %s220 = sand.u32 %s80, 1
        %s221 = smul.addr %s220, 1024
        %s222 = scalar_lea.vmem [#allocation5], %s221
        %p223 = pneg %p93
        %p224 = pneg %p90
        %p225 = pneg %p119
        %p226 = pneg %p116
        %s227 = sand.u32 %s106, 1
        %s228 = scalar_lea.sflag [#allocation4], %s227
        %s229 = sand.u32 %s106, 1
        %s230 = smul.addr %s229, 8
        %s231 = scalar_lea.vmem [#allocation7], %s230
        %s232 = sadd.s32 %s26, %s27
        %p233 = scmp.lt.s32.totalorder %s232, 1
        %s234 = scalar_select %p233, %s232, 1
        %s235 = smul.u32 128, %s234
        %s236 = sadd.s32 %s26, %s27
        %p237 = scmp.lt.s32.totalorder %s236, 1
        %s238 = scalar_select %p237, %s236, 1
        %s239 = smul.u32 128, %s238
        %p240 = scmp.eq.s32.totalorder %s27, 0
        // Predicated region
        $region37: #{tpu_custom_call.1} parent=27 // pred_check
          %p241 = pneg %p240
        $region38: #{tpu_custom_call.1} parent=27 // pred_check_branch
          %243 = sbr.rel (%p241) target = $region40
        $region39: #{tpu_custom_call.1} parent=27 // pred_region
          %244 = vst [vmem:[%s231] sm:$0xff] 0.0
        $region40: #{tpu_custom_call.1} parent=27 // pred_fallthru
          _
        %v245 = vld [vmem:[%s197] sm:$0xff]
        %v246 = vld [vmem:[%s197 + $0x8] sm:$0xff]
        %v247 = vld [vmem:[%s197 + $0x10] sm:$0xff]
        %v248 = vld [vmem:[%s197 + $0x18] sm:$0xff]
        %v249 = vld [vmem:[%s197 + $0x20] sm:$0xff]
        %v250 = vld [vmem:[%s197 + $0x28] sm:$0xff]
        %v251 = vld [vmem:[%s197 + $0x30] sm:$0xff]
        %v252 = vld [vmem:[%s197 + $0x38] sm:$0xff]
        %v253 = vld [vmem:[%s197 + $0x40] sm:$0xff]
        %v254 = vld [vmem:[%s197 + $0x48] sm:$0xff]
        %v255 = vld [vmem:[%s197 + $0x50] sm:$0xff]
        %v256 = vld [vmem:[%s197 + $0x58] sm:$0xff]
        %v257 = vld [vmem:[%s197 + $0x60] sm:$0xff]
        %v258 = vld [vmem:[%s197 + $0x68] sm:$0xff]
        %v259 = vld [vmem:[%s197 + $0x70] sm:$0xff]
        %v260 = vld [vmem:[%s197 + $0x78] sm:$0xff]
        %v261 = vld [vmem:[%s197 + $0x80] sm:$0xff]
        %v262 = vld [vmem:[%s197 + $0x88] sm:$0xff]
        %v263 = vld [vmem:[%s197 + $0x90] sm:$0xff]
        %v264 = vld [vmem:[%s197 + $0x98] sm:$0xff]
        %v265 = vld [vmem:[%s197 + $0xa0] sm:$0xff]
        %v266 = vld [vmem:[%s197 + $0xa8] sm:$0xff]
        %v267 = vld [vmem:[%s197 + $0xb0] sm:$0xff]
        %v268 = vld [vmem:[%s197 + $0xb8] sm:$0xff]
        %v269 = vld [vmem:[%s197 + $0xc0] sm:$0xff]
        %v270 = vld [vmem:[%s197 + $0xc8] sm:$0xff]
        %v271 = vld [vmem:[%s197 + $0xd0] sm:$0xff]
        %v272 = vld [vmem:[%s197 + $0xd8] sm:$0xff]
        %v273 = vld [vmem:[%s197 + $0xe0] sm:$0xff]
        %v274 = vld [vmem:[%s197 + $0xe8] sm:$0xff]
        %v275 = vld [vmem:[%s197 + $0xf0] sm:$0xff]
        %v276 = vld [vmem:[%s197 + $0xf8] sm:$0xff]
        %v277 = vld [vmem:[%s197 + $0x100] sm:$0xff]
        %v278 = vld [vmem:[%s197 + $0x108] sm:$0xff]
        %v279 = vld [vmem:[%s197 + $0x110] sm:$0xff]
        %v280 = vld [vmem:[%s197 + $0x118] sm:$0xff]
        %v281 = vld [vmem:[%s197 + $0x120] sm:$0xff]
        %v282 = vld [vmem:[%s197 + $0x128] sm:$0xff]
        %v283 = vld [vmem:[%s197 + $0x130] sm:$0xff]
        %v284 = vld [vmem:[%s197 + $0x138] sm:$0xff]
        %v285 = vld [vmem:[%s197 + $0x140] sm:$0xff]
        %v286 = vld [vmem:[%s197 + $0x148] sm:$0xff]
        %v287 = vld [vmem:[%s197 + $0x150] sm:$0xff]
        %v288 = vld [vmem:[%s197 + $0x158] sm:$0xff]
        %v289 = vld [vmem:[%s197 + $0x160] sm:$0xff]
        %v290 = vld [vmem:[%s197 + $0x168] sm:$0xff]
        %v291 = vld [vmem:[%s197 + $0x170] sm:$0xff]
        %v292 = vld [vmem:[%s197 + $0x178] sm:$0xff]
        %v293 = vld [vmem:[%s197 + $0x180] sm:$0xff]
        %v294 = vld [vmem:[%s197 + $0x188] sm:$0xff]
        %v295 = vld [vmem:[%s197 + $0x190] sm:$0xff]
        %v296 = vld [vmem:[%s197 + $0x198] sm:$0xff]
        %v297 = vld [vmem:[%s197 + $0x1a0] sm:$0xff]
        %v298 = vld [vmem:[%s197 + $0x1a8] sm:$0xff]
        %v299 = vld [vmem:[%s197 + $0x1b0] sm:$0xff]
        %v300 = vld [vmem:[%s197 + $0x1b8] sm:$0xff]
        %v301 = vld [vmem:[%s197 + $0x1c0] sm:$0xff]
        %v302 = vld [vmem:[%s197 + $0x1c8] sm:$0xff]
        %v303 = vld [vmem:[%s197 + $0x1d0] sm:$0xff]
        %v304 = vld [vmem:[%s197 + $0x1d8] sm:$0xff]
        %v305 = vld [vmem:[%s197 + $0x1e0] sm:$0xff]
        %v306 = vld [vmem:[%s197 + $0x1e8] sm:$0xff]
        %v307 = vld [vmem:[%s197 + $0x1f0] sm:$0xff]
        %v308 = vld [vmem:[%s197 + $0x1f8] sm:$0xff]
        %v309 = vld [vmem:[%s197 + $0x200] sm:$0xff]
        %v310 = vld [vmem:[%s197 + $0x208] sm:$0xff]
        %v311 = vld [vmem:[%s197 + $0x210] sm:$0xff]
        %v312 = vld [vmem:[%s197 + $0x218] sm:$0xff]
        %v313 = vld [vmem:[%s197 + $0x220] sm:$0xff]
        %v314 = vld [vmem:[%s197 + $0x228] sm:$0xff]
        %v315 = vld [vmem:[%s197 + $0x230] sm:$0xff]
        %v316 = vld [vmem:[%s197 + $0x238] sm:$0xff]
        %v317 = vld [vmem:[%s197 + $0x240] sm:$0xff]
        %v318 = vld [vmem:[%s197 + $0x248] sm:$0xff]
        %v319 = vld [vmem:[%s197 + $0x250] sm:$0xff]
        %v320 = vld [vmem:[%s197 + $0x258] sm:$0xff]
        %v321 = vld [vmem:[%s197 + $0x260] sm:$0xff]
        %v322 = vld [vmem:[%s197 + $0x268] sm:$0xff]
        %v323 = vld [vmem:[%s197 + $0x270] sm:$0xff]
        %v324 = vld [vmem:[%s197 + $0x278] sm:$0xff]
        %v325 = vld [vmem:[%s197 + $0x280] sm:$0xff]
        %v326 = vld [vmem:[%s197 + $0x288] sm:$0xff]
        %v327 = vld [vmem:[%s197 + $0x290] sm:$0xff]
        %v328 = vld [vmem:[%s197 + $0x298] sm:$0xff]
        %v329 = vld [vmem:[%s197 + $0x2a0] sm:$0xff]
        %v330 = vld [vmem:[%s197 + $0x2a8] sm:$0xff]
        %v331 = vld [vmem:[%s197 + $0x2b0] sm:$0xff]
        %v332 = vld [vmem:[%s197 + $0x2b8] sm:$0xff]
        %v333 = vld [vmem:[%s197 + $0x2c0] sm:$0xff]
        %v334 = vld [vmem:[%s197 + $0x2c8] sm:$0xff]
        %v335 = vld [vmem:[%s197 + $0x2d0] sm:$0xff]
        %v336 = vld [vmem:[%s197 + $0x2d8] sm:$0xff]
        %v337 = vld [vmem:[%s197 + $0x2e0] sm:$0xff]
        %v338 = vld [vmem:[%s197 + $0x2e8] sm:$0xff]
        %v339 = vld [vmem:[%s197 + $0x2f0] sm:$0xff]
        %v340 = vld [vmem:[%s197 + $0x2f8] sm:$0xff]
        %v341 = vld [vmem:[%s197 + $0x300] sm:$0xff]
        %v342 = vld [vmem:[%s197 + $0x308] sm:$0xff]
        %v343 = vld [vmem:[%s197 + $0x310] sm:$0xff]
        %v344 = vld [vmem:[%s197 + $0x318] sm:$0xff]
        %v345 = vld [vmem:[%s197 + $0x320] sm:$0xff]
        %v346 = vld [vmem:[%s197 + $0x328] sm:$0xff]
        %v347 = vld [vmem:[%s197 + $0x330] sm:$0xff]
        %v348 = vld [vmem:[%s197 + $0x338] sm:$0xff]
        %v349 = vld [vmem:[%s197 + $0x340] sm:$0xff]
        %v350 = vld [vmem:[%s197 + $0x348] sm:$0xff]
        %v351 = vld [vmem:[%s197 + $0x350] sm:$0xff]
        %v352 = vld [vmem:[%s197 + $0x358] sm:$0xff]
        %v353 = vld [vmem:[%s197 + $0x360] sm:$0xff]
        %v354 = vld [vmem:[%s197 + $0x368] sm:$0xff]
        %v355 = vld [vmem:[%s197 + $0x370] sm:$0xff]
        %v356 = vld [vmem:[%s197 + $0x378] sm:$0xff]
        %v357 = vld [vmem:[%s197 + $0x380] sm:$0xff]
        %v358 = vld [vmem:[%s197 + $0x388] sm:$0xff]
        %v359 = vld [vmem:[%s197 + $0x390] sm:$0xff]
        %v360 = vld [vmem:[%s197 + $0x398] sm:$0xff]
        %v361 = vld [vmem:[%s197 + $0x3a0] sm:$0xff]
        %v362 = vld [vmem:[%s197 + $0x3a8] sm:$0xff]
        %v363 = vld [vmem:[%s197 + $0x3b0] sm:$0xff]
        %v364 = vld [vmem:[%s197 + $0x3b8] sm:$0xff]
        %v365 = vld [vmem:[%s197 + $0x3c0] sm:$0xff]
        %v366 = vld [vmem:[%s197 + $0x3c8] sm:$0xff]
        %v367 = vld [vmem:[%s197 + $0x3d0] sm:$0xff]
        %v368 = vld [vmem:[%s197 + $0x3d8] sm:$0xff]
        %v369 = vld [vmem:[%s197 + $0x3e0] sm:$0xff]
        %v370 = vld [vmem:[%s197 + $0x3e8] sm:$0xff]
        %v371 = vld [vmem:[%s197 + $0x3f0] sm:$0xff]
        %v372 = vld [vmem:[%s197 + $0x3f8] sm:$0xff]
        %v373 = vld [vmem:[%s206] sm:$0xff]
        %v374 = vld [vmem:[%s206 + $0x8] sm:$0xff]
        %v375 = vld [vmem:[%s206 + $0x10] sm:$0xff]
        %v376 = vld [vmem:[%s206 + $0x18] sm:$0xff]
        %v377 = vld [vmem:[%s206 + $0x20] sm:$0xff]
        %v378 = vld [vmem:[%s206 + $0x28] sm:$0xff]
        %v379 = vld [vmem:[%s206 + $0x30] sm:$0xff]
        %v380 = vld [vmem:[%s206 + $0x38] sm:$0xff]
        %v381 = vld [vmem:[%s206 + $0x40] sm:$0xff]
        %v382 = vld [vmem:[%s206 + $0x48] sm:$0xff]
        %v383 = vld [vmem:[%s206 + $0x50] sm:$0xff]
        %v384 = vld [vmem:[%s206 + $0x58] sm:$0xff]
        %v385 = vld [vmem:[%s206 + $0x60] sm:$0xff]
        %v386 = vld [vmem:[%s206 + $0x68] sm:$0xff]
        %v387 = vld [vmem:[%s206 + $0x70] sm:$0xff]
        %v388 = vld [vmem:[%s206 + $0x78] sm:$0xff]
        %v389 = vld [vmem:[%s206 + $0x80] sm:$0xff]
        %v390 = vld [vmem:[%s206 + $0x88] sm:$0xff]
        %v391 = vld [vmem:[%s206 + $0x90] sm:$0xff]
        %v392 = vld [vmem:[%s206 + $0x98] sm:$0xff]
        %v393 = vld [vmem:[%s206 + $0xa0] sm:$0xff]
        %v394 = vld [vmem:[%s206 + $0xa8] sm:$0xff]
        %v395 = vld [vmem:[%s206 + $0xb0] sm:$0xff]
        %v396 = vld [vmem:[%s206 + $0xb8] sm:$0xff]
        %v397 = vld [vmem:[%s206 + $0xc0] sm:$0xff]
        %v398 = vld [vmem:[%s206 + $0xc8] sm:$0xff]
        %v399 = vld [vmem:[%s206 + $0xd0] sm:$0xff]
        %v400 = vld [vmem:[%s206 + $0xd8] sm:$0xff]
        %v401 = vld [vmem:[%s206 + $0xe0] sm:$0xff]
        %v402 = vld [vmem:[%s206 + $0xe8] sm:$0xff]
        %v403 = vld [vmem:[%s206 + $0xf0] sm:$0xff]
        %v404 = vld [vmem:[%s206 + $0xf8] sm:$0xff]
        %v405 = vld [vmem:[%s206 + $0x100] sm:$0xff]
        %v406 = vld [vmem:[%s206 + $0x108] sm:$0xff]
        %v407 = vld [vmem:[%s206 + $0x110] sm:$0xff]
        %v408 = vld [vmem:[%s206 + $0x118] sm:$0xff]
        %v409 = vld [vmem:[%s206 + $0x120] sm:$0xff]
        %v410 = vld [vmem:[%s206 + $0x128] sm:$0xff]
        %v411 = vld [vmem:[%s206 + $0x130] sm:$0xff]
        %v412 = vld [vmem:[%s206 + $0x138] sm:$0xff]
        %v413 = vld [vmem:[%s206 + $0x140] sm:$0xff]
        %v414 = vld [vmem:[%s206 + $0x148] sm:$0xff]
        %v415 = vld [vmem:[%s206 + $0x150] sm:$0xff]
        %v416 = vld [vmem:[%s206 + $0x158] sm:$0xff]
        %v417 = vld [vmem:[%s206 + $0x160] sm:$0xff]
        %v418 = vld [vmem:[%s206 + $0x168] sm:$0xff]
        %v419 = vld [vmem:[%s206 + $0x170] sm:$0xff]
        %v420 = vld [vmem:[%s206 + $0x178] sm:$0xff]
        %v421 = vld [vmem:[%s206 + $0x180] sm:$0xff]
        %v422 = vld [vmem:[%s206 + $0x188] sm:$0xff]
        %v423 = vld [vmem:[%s206 + $0x190] sm:$0xff]
        %v424 = vld [vmem:[%s206 + $0x198] sm:$0xff]
        %v425 = vld [vmem:[%s206 + $0x1a0] sm:$0xff]
        %v426 = vld [vmem:[%s206 + $0x1a8] sm:$0xff]
        %v427 = vld [vmem:[%s206 + $0x1b0] sm:$0xff]
        %v428 = vld [vmem:[%s206 + $0x1b8] sm:$0xff]
        %v429 = vld [vmem:[%s206 + $0x1c0] sm:$0xff]
        %v430 = vld [vmem:[%s206 + $0x1c8] sm:$0xff]
        %v431 = vld [vmem:[%s206 + $0x1d0] sm:$0xff]
        %v432 = vld [vmem:[%s206 + $0x1d8] sm:$0xff]
        %v433 = vld [vmem:[%s206 + $0x1e0] sm:$0xff]
        %v434 = vld [vmem:[%s206 + $0x1e8] sm:$0xff]
        %v435 = vld [vmem:[%s206 + $0x1f0] sm:$0xff]
        %v436 = vld [vmem:[%s206 + $0x1f8] sm:$0xff]
        %v437 = vld [vmem:[%s206 + $0x200] sm:$0xff]
        %v438 = vld [vmem:[%s206 + $0x208] sm:$0xff]
        %v439 = vld [vmem:[%s206 + $0x210] sm:$0xff]
        %v440 = vld [vmem:[%s206 + $0x218] sm:$0xff]
        %v441 = vld [vmem:[%s206 + $0x220] sm:$0xff]
        %v442 = vld [vmem:[%s206 + $0x228] sm:$0xff]
        %v443 = vld [vmem:[%s206 + $0x230] sm:$0xff]
        %v444 = vld [vmem:[%s206 + $0x238] sm:$0xff]
        %v445 = vld [vmem:[%s206 + $0x240] sm:$0xff]
        %v446 = vld [vmem:[%s206 + $0x248] sm:$0xff]
        %v447 = vld [vmem:[%s206 + $0x250] sm:$0xff]
        %v448 = vld [vmem:[%s206 + $0x258] sm:$0xff]
        %v449 = vld [vmem:[%s206 + $0x260] sm:$0xff]
        %v450 = vld [vmem:[%s206 + $0x268] sm:$0xff]
        %v451 = vld [vmem:[%s206 + $0x270] sm:$0xff]
        %v452 = vld [vmem:[%s206 + $0x278] sm:$0xff]
        %v453 = vld [vmem:[%s206 + $0x280] sm:$0xff]
        %v454 = vld [vmem:[%s206 + $0x288] sm:$0xff]
        %v455 = vld [vmem:[%s206 + $0x290] sm:$0xff]
        %v456 = vld [vmem:[%s206 + $0x298] sm:$0xff]
        %v457 = vld [vmem:[%s206 + $0x2a0] sm:$0xff]
        %v458 = vld [vmem:[%s206 + $0x2a8] sm:$0xff]
        %v459 = vld [vmem:[%s206 + $0x2b0] sm:$0xff]
        %v460 = vld [vmem:[%s206 + $0x2b8] sm:$0xff]
        %v461 = vld [vmem:[%s206 + $0x2c0] sm:$0xff]
        %v462 = vld [vmem:[%s206 + $0x2c8] sm:$0xff]
        %v463 = vld [vmem:[%s206 + $0x2d0] sm:$0xff]
        %v464 = vld [vmem:[%s206 + $0x2d8] sm:$0xff]
        %v465 = vld [vmem:[%s206 + $0x2e0] sm:$0xff]
        %v466 = vld [vmem:[%s206 + $0x2e8] sm:$0xff]
        %v467 = vld [vmem:[%s206 + $0x2f0] sm:$0xff]
        %v468 = vld [vmem:[%s206 + $0x2f8] sm:$0xff]
        %v469 = vld [vmem:[%s206 + $0x300] sm:$0xff]
        %v470 = vld [vmem:[%s206 + $0x308] sm:$0xff]
        %v471 = vld [vmem:[%s206 + $0x310] sm:$0xff]
        %v472 = vld [vmem:[%s206 + $0x318] sm:$0xff]
        %v473 = vld [vmem:[%s206 + $0x320] sm:$0xff]
        %v474 = vld [vmem:[%s206 + $0x328] sm:$0xff]
        %v475 = vld [vmem:[%s206 + $0x330] sm:$0xff]
        %v476 = vld [vmem:[%s206 + $0x338] sm:$0xff]
        %v477 = vld [vmem:[%s206 + $0x340] sm:$0xff]
        %v478 = vld [vmem:[%s206 + $0x348] sm:$0xff]
        %v479 = vld [vmem:[%s206 + $0x350] sm:$0xff]
        %v480 = vld [vmem:[%s206 + $0x358] sm:$0xff]
        %v481 = vld [vmem:[%s206 + $0x360] sm:$0xff]
        %v482 = vld [vmem:[%s206 + $0x368] sm:$0xff]
        %v483 = vld [vmem:[%s206 + $0x370] sm:$0xff]
        %v484 = vld [vmem:[%s206 + $0x378] sm:$0xff]
        %v485 = vld [vmem:[%s206 + $0x380] sm:$0xff]
        %v486 = vld [vmem:[%s206 + $0x388] sm:$0xff]
        %v487 = vld [vmem:[%s206 + $0x390] sm:$0xff]
        %v488 = vld [vmem:[%s206 + $0x398] sm:$0xff]
        %v489 = vld [vmem:[%s206 + $0x3a0] sm:$0xff]
        %v490 = vld [vmem:[%s206 + $0x3a8] sm:$0xff]
        %v491 = vld [vmem:[%s206 + $0x3b0] sm:$0xff]
        %v492 = vld [vmem:[%s206 + $0x3b8] sm:$0xff]
        %v493 = vld [vmem:[%s206 + $0x3c0] sm:$0xff]
        %v494 = vld [vmem:[%s206 + $0x3c8] sm:$0xff]
        %v495 = vld [vmem:[%s206 + $0x3d0] sm:$0xff]
        %v496 = vld [vmem:[%s206 + $0x3d8] sm:$0xff]
        %v497 = vld [vmem:[%s206 + $0x3e0] sm:$0xff]
        %v498 = vld [vmem:[%s206 + $0x3e8] sm:$0xff]
        %v499 = vld [vmem:[%s206 + $0x3f0] sm:$0xff]
        %v500 = vld [vmem:[%s206 + $0x3f8] sm:$0xff]
        %v501 = vsub.f32 %v245, %v373
        %v502 = vsub.f32 %v246, %v374
        %v503 = vsub.f32 %v247, %v375
        %v504 = vsub.f32 %v248, %v376
        %v505 = vsub.f32 %v249, %v377
        %v506 = vsub.f32 %v250, %v378
        %v507 = vsub.f32 %v251, %v379
        %v508 = vsub.f32 %v252, %v380
        %v509 = vsub.f32 %v253, %v381
        %v510 = vsub.f32 %v254, %v382
        %v511 = vsub.f32 %v255, %v383
        %v512 = vsub.f32 %v256, %v384
        %v513 = vsub.f32 %v257, %v385
        %v514 = vsub.f32 %v258, %v386
        %v515 = vsub.f32 %v259, %v387
        %v516 = vsub.f32 %v260, %v388
        %v517 = vsub.f32 %v261, %v389
        %v518 = vsub.f32 %v262, %v390
        %v519 = vsub.f32 %v263, %v391
        %v520 = vsub.f32 %v264, %v392
        %v521 = vsub.f32 %v265, %v393
        %v522 = vsub.f32 %v266, %v394
        %v523 = vsub.f32 %v267, %v395
        %v524 = vsub.f32 %v268, %v396
        %v525 = vsub.f32 %v269, %v397
        %v526 = vsub.f32 %v270, %v398
        %v527 = vsub.f32 %v271, %v399
        %v528 = vsub.f32 %v272, %v400
        %v529 = vsub.f32 %v273, %v401
        %v530 = vsub.f32 %v274, %v402
        %v531 = vsub.f32 %v275, %v403
        %v532 = vsub.f32 %v276, %v404
        %v533 = vsub.f32 %v277, %v405
        %v534 = vsub.f32 %v278, %v406
        %v535 = vsub.f32 %v279, %v407
        %v536 = vsub.f32 %v280, %v408
        %v537 = vsub.f32 %v281, %v409
        %v538 = vsub.f32 %v282, %v410
        %v539 = vsub.f32 %v283, %v411
        %v540 = vsub.f32 %v284, %v412
        %v541 = vsub.f32 %v285, %v413
        %v542 = vsub.f32 %v286, %v414
        %v543 = vsub.f32 %v287, %v415
        %v544 = vsub.f32 %v288, %v416
        %v545 = vsub.f32 %v289, %v417
        %v546 = vsub.f32 %v290, %v418
        %v547 = vsub.f32 %v291, %v419
        %v548 = vsub.f32 %v292, %v420
        %v549 = vsub.f32 %v293, %v421
        %v550 = vsub.f32 %v294, %v422
        %v551 = vsub.f32 %v295, %v423
        %v552 = vsub.f32 %v296, %v424
        %v553 = vsub.f32 %v297, %v425
        %v554 = vsub.f32 %v298, %v426
        %v555 = vsub.f32 %v299, %v427
        %v556 = vsub.f32 %v300, %v428
        %v557 = vsub.f32 %v301, %v429
        %v558 = vsub.f32 %v302, %v430
        %v559 = vsub.f32 %v303, %v431
        %v560 = vsub.f32 %v304, %v432
        %v561 = vsub.f32 %v305, %v433
        %v562 = vsub.f32 %v306, %v434
        %v563 = vsub.f32 %v307, %v435
        %v564 = vsub.f32 %v308, %v436
        %v565 = vsub.f32 %v309, %v437
        %v566 = vsub.f32 %v310, %v438
        %v567 = vsub.f32 %v311, %v439
        %v568 = vsub.f32 %v312, %v440
        %v569 = vsub.f32 %v313, %v441
        %v570 = vsub.f32 %v314, %v442
        %v571 = vsub.f32 %v315, %v443
        %v572 = vsub.f32 %v316, %v444
        %v573 = vsub.f32 %v317, %v445
        %v574 = vsub.f32 %v318, %v446
        %v575 = vsub.f32 %v319, %v447
        %v576 = vsub.f32 %v320, %v448
        %v577 = vsub.f32 %v321, %v449
        %v578 = vsub.f32 %v322, %v450
        %v579 = vsub.f32 %v323, %v451
        %v580 = vsub.f32 %v324, %v452
        %v581 = vsub.f32 %v325, %v453
        %v582 = vsub.f32 %v326, %v454
        %v583 = vsub.f32 %v327, %v455
        %v584 = vsub.f32 %v328, %v456
        %v585 = vsub.f32 %v329, %v457
        %v586 = vsub.f32 %v330, %v458
        %v587 = vsub.f32 %v331, %v459
        %v588 = vsub.f32 %v332, %v460
        %v589 = vsub.f32 %v333, %v461
        %v590 = vsub.f32 %v334, %v462
        %v591 = vsub.f32 %v335, %v463
        %v592 = vsub.f32 %v336, %v464
        %v593 = vsub.f32 %v337, %v465
        %v594 = vsub.f32 %v338, %v466
        %v595 = vsub.f32 %v339, %v467
        %v596 = vsub.f32 %v340, %v468
        %v597 = vsub.f32 %v341, %v469
        %v598 = vsub.f32 %v342, %v470
        %v599 = vsub.f32 %v343, %v471
        %v600 = vsub.f32 %v344, %v472
        %v601 = vsub.f32 %v345, %v473
        %v602 = vsub.f32 %v346, %v474
        %v603 = vsub.f32 %v347, %v475
        %v604 = vsub.f32 %v348, %v476
        %v605 = vsub.f32 %v349, %v477
        %v606 = vsub.f32 %v350, %v478
        %v607 = vsub.f32 %v351, %v479
        %v608 = vsub.f32 %v352, %v480
        %v609 = vsub.f32 %v353, %v481
        %v610 = vsub.f32 %v354, %v482
        %v611 = vsub.f32 %v355, %v483
        %v612 = vsub.f32 %v356, %v484
        %v613 = vsub.f32 %v357, %v485
        %v614 = vsub.f32 %v358, %v486
        %v615 = vsub.f32 %v359, %v487
        %v616 = vsub.f32 %v360, %v488
        %v617 = vsub.f32 %v361, %v489
        %v618 = vsub.f32 %v362, %v490
        %v619 = vsub.f32 %v363, %v491
        %v620 = vsub.f32 %v364, %v492
        %v621 = vsub.f32 %v365, %v493
        %v622 = vsub.f32 %v366, %v494
        %v623 = vsub.f32 %v367, %v495
        %v624 = vsub.f32 %v368, %v496
        %v625 = vsub.f32 %v369, %v497
        %v626 = vsub.f32 %v370, %v498
        %v627 = vsub.f32 %v371, %v499
        %v628 = vsub.f32 %v372, %v500
        %v629 = vmax.f32 %v501, 0.0
        %v630 = vmax.f32 %v502, 0.0
        %v631 = vmax.f32 %v503, 0.0
        %v632 = vmax.f32 %v504, 0.0
        %v633 = vmax.f32 %v505, 0.0
        %v634 = vmax.f32 %v506, 0.0
        %v635 = vmax.f32 %v507, 0.0
        %v636 = vmax.f32 %v508, 0.0
        %v637 = vmax.f32 %v509, 0.0
        %v638 = vmax.f32 %v510, 0.0
        %v639 = vmax.f32 %v511, 0.0
        %v640 = vmax.f32 %v512, 0.0
        %v641 = vmax.f32 %v513, 0.0
        %v642 = vmax.f32 %v514, 0.0
        %v643 = vmax.f32 %v515, 0.0
        %v644 = vmax.f32 %v516, 0.0
        %v645 = vmax.f32 %v517, 0.0
        %v646 = vmax.f32 %v518, 0.0
        %v647 = vmax.f32 %v519, 0.0
        %v648 = vmax.f32 %v520, 0.0
        %v649 = vmax.f32 %v521, 0.0
        %v650 = vmax.f32 %v522, 0.0
        %v651 = vmax.f32 %v523, 0.0
        %v652 = vmax.f32 %v524, 0.0
        %v653 = vmax.f32 %v525, 0.0
        %v654 = vmax.f32 %v526, 0.0
        %v655 = vmax.f32 %v527, 0.0
        %v656 = vmax.f32 %v528, 0.0
        %v657 = vmax.f32 %v529, 0.0
        %v658 = vmax.f32 %v530, 0.0
        %v659 = vmax.f32 %v531, 0.0
        %v660 = vmax.f32 %v532, 0.0
        %v661 = vmax.f32 %v533, 0.0
        %v662 = vmax.f32 %v534, 0.0
        %v663 = vmax.f32 %v535, 0.0
        %v664 = vmax.f32 %v536, 0.0
        %v665 = vmax.f32 %v537, 0.0
        %v666 = vmax.f32 %v538, 0.0
        %v667 = vmax.f32 %v539, 0.0
        %v668 = vmax.f32 %v540, 0.0
        %v669 = vmax.f32 %v541, 0.0
        %v670 = vmax.f32 %v542, 0.0
        %v671 = vmax.f32 %v543, 0.0
        %v672 = vmax.f32 %v544, 0.0
        %v673 = vmax.f32 %v545, 0.0
        %v674 = vmax.f32 %v546, 0.0
        %v675 = vmax.f32 %v547, 0.0
        %v676 = vmax.f32 %v548, 0.0
        %v677 = vmax.f32 %v549, 0.0
        %v678 = vmax.f32 %v550, 0.0
        %v679 = vmax.f32 %v551, 0.0
        %v680 = vmax.f32 %v552, 0.0
        %v681 = vmax.f32 %v553, 0.0
        %v682 = vmax.f32 %v554, 0.0
        %v683 = vmax.f32 %v555, 0.0
        %v684 = vmax.f32 %v556, 0.0
        %v685 = vmax.f32 %v557, 0.0
        %v686 = vmax.f32 %v558, 0.0
        %v687 = vmax.f32 %v559, 0.0
        %v688 = vmax.f32 %v560, 0.0
        %v689 = vmax.f32 %v561, 0.0
        %v690 = vmax.f32 %v562, 0.0
        %v691 = vmax.f32 %v563, 0.0
        %v692 = vmax.f32 %v564, 0.0
        %v693 = vmax.f32 %v565, 0.0
        %v694 = vmax.f32 %v566, 0.0
        %v695 = vmax.f32 %v567, 0.0
        %v696 = vmax.f32 %v568, 0.0
        %v697 = vmax.f32 %v569, 0.0
        %v698 = vmax.f32 %v570, 0.0
        %v699 = vmax.f32 %v571, 0.0
        %v700 = vmax.f32 %v572, 0.0
        %v701 = vmax.f32 %v573, 0.0
        %v702 = vmax.f32 %v574, 0.0
        %v703 = vmax.f32 %v575, 0.0
        %v704 = vmax.f32 %v576, 0.0
        %v705 = vmax.f32 %v577, 0.0
        %v706 = vmax.f32 %v578, 0.0
        %v707 = vmax.f32 %v579, 0.0
        %v708 = vmax.f32 %v580, 0.0
        %v709 = vmax.f32 %v581, 0.0
        %v710 = vmax.f32 %v582, 0.0
        %v711 = vmax.f32 %v583, 0.0
        %v712 = vmax.f32 %v584, 0.0
        %v713 = vmax.f32 %v585, 0.0
        %v714 = vmax.f32 %v586, 0.0
        %v715 = vmax.f32 %v587, 0.0
        %v716 = vmax.f32 %v588, 0.0
        %v717 = vmax.f32 %v589, 0.0
        %v718 = vmax.f32 %v590, 0.0
        %v719 = vmax.f32 %v591, 0.0
        %v720 = vmax.f32 %v592, 0.0
        %v721 = vmax.f32 %v593, 0.0
        %v722 = vmax.f32 %v594, 0.0
        %v723 = vmax.f32 %v595, 0.0
        %v724 = vmax.f32 %v596, 0.0
        %v725 = vmax.f32 %v597, 0.0
        %v726 = vmax.f32 %v598, 0.0
        %v727 = vmax.f32 %v599, 0.0
        %v728 = vmax.f32 %v600, 0.0
        %v729 = vmax.f32 %v601, 0.0
        %v730 = vmax.f32 %v602, 0.0
        %v731 = vmax.f32 %v603, 0.0
        %v732 = vmax.f32 %v604, 0.0
        %v733 = vmax.f32 %v605, 0.0
        %v734 = vmax.f32 %v606, 0.0
        %v735 = vmax.f32 %v607, 0.0
        %v736 = vmax.f32 %v608, 0.0
        %v737 = vmax.f32 %v609, 0.0
        %v738 = vmax.f32 %v610, 0.0
        %v739 = vmax.f32 %v611, 0.0
        %v740 = vmax.f32 %v612, 0.0
        %v741 = vmax.f32 %v613, 0.0
        %v742 = vmax.f32 %v614, 0.0
        %v743 = vmax.f32 %v615, 0.0
        %v744 = vmax.f32 %v616, 0.0
        %v745 = vmax.f32 %v617, 0.0
        %v746 = vmax.f32 %v618, 0.0
        %v747 = vmax.f32 %v619, 0.0
        %v748 = vmax.f32 %v620, 0.0
        %v749 = vmax.f32 %v621, 0.0
        %v750 = vmax.f32 %v622, 0.0
        %v751 = vmax.f32 %v623, 0.0
        %v752 = vmax.f32 %v624, 0.0
        %v753 = vmax.f32 %v625, 0.0
        %v754 = vmax.f32 %v626, 0.0
        %v755 = vmax.f32 %v627, 0.0
        %v756 = vmax.f32 %v628, 0.0
        %v757 = vld [vmem:[%s231] sm:$0xff]
        %v758 = vadd.f32 %v629, %v630
        %v759 = vadd.f32 %v758, %v631
        %v760 = vadd.f32 %v759, %v632
        %v761 = vadd.f32 %v760, %v633
        %v762 = vadd.f32 %v761, %v634
        %v763 = vadd.f32 %v762, %v635
        %v764 = vadd.f32 %v763, %v636
        %v765 = vadd.f32 %v764, %v637
        %v766 = vadd.f32 %v765, %v638
        %v767 = vadd.f32 %v766, %v639
        %v768 = vadd.f32 %v767, %v640
        %v769 = vadd.f32 %v768, %v641
        %v770 = vadd.f32 %v769, %v642
        %v771 = vadd.f32 %v770, %v643
        %v772 = vadd.f32 %v771, %v644
        %v773 = vadd.f32 %v645, %v646
        %v774 = vadd.f32 %v773, %v647
        %v775 = vadd.f32 %v774, %v648
        %v776 = vadd.f32 %v775, %v649
        %v777 = vadd.f32 %v776, %v650
        %v778 = vadd.f32 %v777, %v651
        %v779 = vadd.f32 %v778, %v652
        %v780 = vadd.f32 %v779, %v653
        %v781 = vadd.f32 %v780, %v654
        %v782 = vadd.f32 %v781, %v655
        %v783 = vadd.f32 %v782, %v656
        %v784 = vadd.f32 %v783, %v657
        %v785 = vadd.f32 %v784, %v658
        %v786 = vadd.f32 %v785, %v659
        %v787 = vadd.f32 %v786, %v660
        %v788 = vadd.f32 %v661, %v662
        %v789 = vadd.f32 %v788, %v663
        %v790 = vadd.f32 %v789, %v664
        %v791 = vadd.f32 %v790, %v665
        %v792 = vadd.f32 %v791, %v666
        %v793 = vadd.f32 %v792, %v667
        %v794 = vadd.f32 %v793, %v668
        %v795 = vadd.f32 %v794, %v669
        %v796 = vadd.f32 %v795, %v670
        %v797 = vadd.f32 %v796, %v671
        %v798 = vadd.f32 %v797, %v672
        %v799 = vadd.f32 %v798, %v673
        %v800 = vadd.f32 %v799, %v674
        %v801 = vadd.f32 %v800, %v675
        %v802 = vadd.f32 %v801, %v676
        %v803 = vadd.f32 %v677, %v678
        %v804 = vadd.f32 %v803, %v679
        %v805 = vadd.f32 %v804, %v680
        %v806 = vadd.f32 %v805, %v681
        %v807 = vadd.f32 %v806, %v682
        %v808 = vadd.f32 %v807, %v683
        %v809 = vadd.f32 %v808, %v684
        %v810 = vadd.f32 %v809, %v685
        %v811 = vadd.f32 %v810, %v686
        %v812 = vadd.f32 %v811, %v687
        %v813 = vadd.f32 %v812, %v688
        %v814 = vadd.f32 %v813, %v689
        %v815 = vadd.f32 %v814, %v690
        %v816 = vadd.f32 %v815, %v691
        %v817 = vadd.f32 %v816, %v692
        %v818 = vadd.f32 %v693, %v694
        %v819 = vadd.f32 %v818, %v695
        %v820 = vadd.f32 %v819, %v696
        %v821 = vadd.f32 %v820, %v697
        %v822 = vadd.f32 %v821, %v698
        %v823 = vadd.f32 %v822, %v699
        %v824 = vadd.f32 %v823, %v700
        %v825 = vadd.f32 %v824, %v701
        %v826 = vadd.f32 %v825, %v702
        %v827 = vadd.f32 %v826, %v703
        %v828 = vadd.f32 %v827, %v704
        %v829 = vadd.f32 %v828, %v705
        %v830 = vadd.f32 %v829, %v706
        %v831 = vadd.f32 %v830, %v707
        %v832 = vadd.f32 %v831, %v708
        %v833 = vadd.f32 %v709, %v710
        %v834 = vadd.f32 %v833, %v711
        %v835 = vadd.f32 %v834, %v712
        %v836 = vadd.f32 %v835, %v713
        %v837 = vadd.f32 %v836, %v714
        %v838 = vadd.f32 %v837, %v715
        %v839 = vadd.f32 %v838, %v716
        %v840 = vadd.f32 %v839, %v717
        %v841 = vadd.f32 %v840, %v718
        %v842 = vadd.f32 %v841, %v719
        %v843 = vadd.f32 %v842, %v720
        %v844 = vadd.f32 %v843, %v721
        %v845 = vadd.f32 %v844, %v722
        %v846 = vadd.f32 %v845, %v723
        %v847 = vadd.f32 %v846, %v724
        %v848 = vadd.f32 %v725, %v726
        %v849 = vadd.f32 %v848, %v727
        %v850 = vadd.f32 %v849, %v728
        %v851 = vadd.f32 %v850, %v729
        %v852 = vadd.f32 %v851, %v730
        %v853 = vadd.f32 %v852, %v731
        %v854 = vadd.f32 %v853, %v732
        %v855 = vadd.f32 %v854, %v733
        %v856 = vadd.f32 %v855, %v734
        %v857 = vadd.f32 %v856, %v735
        %v858 = vadd.f32 %v857, %v736
        %v859 = vadd.f32 %v858, %v737
        %v860 = vadd.f32 %v859, %v738
        %v861 = vadd.f32 %v860, %v739
        %v862 = vadd.f32 %v861, %v740
        %v863 = vadd.f32 %v741, %v742
        %v864 = vadd.f32 %v863, %v743
        %v865 = vadd.f32 %v864, %v744
        %v866 = vadd.f32 %v865, %v745
        %v867 = vadd.f32 %v866, %v746
        %v868 = vadd.f32 %v867, %v747
        %v869 = vadd.f32 %v868, %v748
        %v870 = vadd.f32 %v869, %v749
        %v871 = vadd.f32 %v870, %v750
        %v872 = vadd.f32 %v871, %v751
        %v873 = vadd.f32 %v872, %v752
        %v874 = vadd.f32 %v873, %v753
        %v875 = vadd.f32 %v874, %v754
        %v876 = vadd.f32 %v875, %v755
        %v877 = vadd.f32 %v876, %v756
        %v878 = vadd.f32 %v772, %v787
        %v879 = vadd.f32 %v878, %v802
        %v880 = vadd.f32 %v879, %v817
        %v881 = vadd.f32 %v880, %v832
        %v882 = vadd.f32 %v881, %v847
        %v883 = vadd.f32 %v882, %v862
        %v884 = vadd.f32 %v883, %v877
        %v885 = vadd.f32 %v757, %v884
        %886 = vst [vmem:[%s231] sm:$0xff] %v885
        %s887 = sand.u32 %s106, 1
        %s888 = scalar_lea.sflag [#allocation4], %s887
        %s889 = sand.u32 %s106, 1
        %s890 = smul.addr %s889, 8
        %s891 = scalar_lea.vmem [#allocation7], %s890
        // Predicated region
        $region41: #{tpu_custom_call.1} parent=27 // pred_check
          %p892 = pneg %p116
        $region42: #{tpu_custom_call.1} parent=27 // pred_check_branch
          %894 = sbr.rel (%p892) target = $region44
        $region43: #{tpu_custom_call.1} parent=27 // pred_region
          %s896 = ssub.s32 128, 128
          %897 = vsyncadd %s888, %s896
          %s898 = smul.addr %s26, 128
          %s899 = scalar_lea.hbm %s2, %s898
          %s901 = sshll.u32 %s891, 4
          %s902 = int_to_ptr.vmem [resolvable:$true] %s901
          %904 = dma.vmem_to_hbm [thread:$0]  %s902, 128, %s899, %s888
        $region44: #{tpu_custom_call.1} parent=27 // pred_fallthru
          _
      $region28: #{tpu_custom_call.1} parent=5 // pred_fallthru
        _
      %p905 = scmp.le.s32.totalorder 2, %s17
      // Predicated region
      $region45: #{tpu_custom_call.1} parent=5 // pred_check
        %p906 = pneg %p905
      $region46: #{tpu_custom_call.1} parent=5 // pred_check_branch
        %908 = sbr.rel (%p906) target = $region48
      $region47: #{tpu_custom_call.1} parent=5 // pred_region
        %s909 = ssub.s32 %s17, 2
        // Predicated region
        $region49: #{tpu_custom_call.1} parent=47 // pred_check
          %p910 = pneg %p122
        $region50: #{tpu_custom_call.1} parent=47 // pred_check_branch
          %912 = sbr.rel (%p910) target = $region52
        $region51: #{tpu_custom_call.1} parent=47 // pred_region
          %s913 = sand.u32 %s107, 1
          %s914 = scalar_lea.sflag [#allocation4], %s913
          %s915 = sand.u32 %s107, 1
          %s916 = smul.addr %s915, 8
          %s917 = scalar_lea.vmem [#allocation7], %s916
          %918 = dma.done %s914, 128
        $region52: #{tpu_custom_call.1} parent=47 // pred_fallthru
          _
      $region48: #{tpu_custom_call.1} parent=5 // pred_fallthru
        _
    $region6: #{tpu_custom_call.1} parent=1 // loop_footer
      %s21 = sadd.s32 1, %s17
    $region7: #{tpu_custom_call.1} parent=1 // loop_footer_branch
      %16 = sbr.rel target = $region3
    $region8: #{tpu_custom_call.1} parent=1 // loop_exit
      _
    %919 = vsyncpa [#allocation3], 1
    %s920 = scalar_lea.sflag [#allocation3], 1
    %921 = vsyncpa %s920, 1
    %922 = vsyncpa [#allocation6], 1
    %s923 = scalar_lea.sflag [#allocation6], 1
    %924 = vsyncpa %s923, 1
    %925 = vsyncpa [#allocation4], 1
    %s926 = scalar_lea.sflag [#allocation4], 1
    %927 = vsyncpa %s926, 1

</llo_original>
